<compile_context>
chip_gen: v7x
topology: tpu7x:2x2x1
jax: 0.10.0
libtpu: 0.0.40
codegen_flags: <defaults>
</compile_context>

<pallas_src>
import jax
import jax.numpy as jnp
import numpy as np
from jax.experimental import pallas as pl
from jax.experimental.pallas import tpu as pltpu

# ----- model dims (small, consistent with the module's __init__) -----
SHAPE_EMB_DIM = 16      # args.shape_emb_dim
FT_DIM = 48             # fasttext_emb.weight.size(1)
REPR_DIM = SHAPE_EMB_DIM + FT_DIM            # self.repr_dim = 64
RELEARN_DIM = 32        # args.relearn_dim  (token_in_dim)
NTAGS = 8
NSHAPES = 12
FT_VOCAB = 50


def _round_up(x, m):
    return (x + m - 1) // m * m


def _cdiv(a, b):
    return (a + b - 1) // b


def tagger_kernel(idx_ref, lsh_ref, lft_ref, b_ref, out_ref):
    """Per-tile hot path; tokens live on the 128-lane axis.

    idx : (3, TM) int32  — rows = [shape index, fasttext index, gold tag].
    lsh : (NTAGS, nsh_pad) bf16 — fused per-shape-vocab logit table.
    lft : (NTAGS, nft_pad) bf16 — fused per-fasttext-vocab logit table.
    b   : (NTAGS, 1) f32        — fused bias.
    out : (2, TM) f32           — row 0 = pred (exact small ints), row 1 = nll.
    """
    idx = idx_ref[...]
    si = idx[0:1, :]                       # (1, TM)
    fi = idx[1:2, :]
    tg = idx[2:3, :]
    tm = idx.shape[1]
    nsh = lsh_ref.shape[1]
    nft = lft_ref.shape[1]

    # Single iota per step, reused for both one-hots and the tag row mask.
    iota = jax.lax.broadcasted_iota(jnp.int32, (nft, tm), 0)     # (nft_pad, TM)
    sh_oh = (iota[:nsh, :] == si).astype(jnp.bfloat16)           # (nsh_pad, TM)
    ft_oh = (iota == fi).astype(jnp.bfloat16)                    # (nft_pad, TM)

    # Fully fused (embedding gather -> relearn -> out): two tiny bf16 MXU
    # matmuls, f32 accumulation, straight to the 8 tag logits.
    logits = (jnp.dot(lsh_ref[...], sh_oh, preferred_element_type=jnp.float32)
              + jnp.dot(lft_ref[...], ft_oh, preferred_element_type=jnp.float32)
              + b_ref[...])                                      # (8, TM)

    # Log-softmax pieces along the 8-row tag (sublane) axis.
    m = jnp.max(logits, axis=0, keepdims=True)                   # (1, TM)
    z = logits - m
    lse = jnp.log(jnp.sum(jnp.exp(z), axis=0, keepdims=True))    # (1, TM)

    row = iota[:NTAGS, :]                                        # (8, TM) int32
    z_t = jnp.sum(jnp.where(row == tg, z, 0.0), axis=0, keepdims=True)
    nll = jnp.where(tg != -1, lse - z_t, 0.0)                    # (1, TM)

    # argmax over tags == argmax of softmax (monotone); first max index.
    pred = jnp.min(jnp.where(logits == m, row, NTAGS),
                   axis=0, keepdims=True)                        # (1, TM) int32

    # Pack the two outputs into a single lane-dense (2, TM) store.
    out_ref[...] = jnp.concatenate([pred.astype(jnp.float32), nll], axis=0)


def init_params(key):
    k = jax.random.split(key, 6)
    s = 0.1
    return {
        "shape_emb":    (s * jax.random.normal(k[0], (NSHAPES, SHAPE_EMB_DIM))).astype(jnp.float32),
        "fasttext_emb": (s * jax.random.normal(k[1], (FT_VOCAB, FT_DIM))).astype(jnp.float32),
        "relearn_w":    (s * jax.random.normal(k[2], (REPR_DIM, RELEARN_DIM))).astype(jnp.float32),
        "relearn_b":    (s * jax.random.normal(k[3], (1, RELEARN_DIM))).astype(jnp.float32),
        "out_w":        (s * jax.random.normal(k[4], (RELEARN_DIM, NTAGS))).astype(jnp.float32),
        "out_b":        (s * jax.random.normal(k[5], (1, NTAGS))).astype(jnp.float32),
    }


def sequence_tagger_forward(token_shape, fasttext, tag_true, params,
                            tile_tokens=16384):
    B, T = token_shape.shape
    N = B * T

    # --- fuse relearn -> out (exact in eval mode: dropout identity, no
    #     nonlinearity between them), then fold the embedding tables in -------
    hi = jax.lax.Precision.HIGHEST
    w_fused = jnp.dot(params["relearn_w"], params["out_w"], precision=hi)   # (64, 8)
    b_fused = (jnp.dot(params["relearn_b"], params["out_w"], precision=hi)
               + params["out_b"])                                           # (1, 8)
    w_t = w_fused.T                                                         # (8, 64)
    w_sh, w_ft = w_t[:, :SHAPE_EMB_DIM], w_t[:, SHAPE_EMB_DIM:]             # (8,16)/(8,48)

    nsh_pad, nft_pad = _round_up(NSHAPES, 8), _round_up(FT_VOCAB, 8)
    l_sh = jnp.zeros((NTAGS, nsh_pad), jnp.float32).at[:, :NSHAPES].set(
        jnp.dot(w_sh, params["shape_emb"].T, precision=hi)).astype(jnp.bfloat16)
    l_ft = jnp.zeros((NTAGS, nft_pad), jnp.float32).at[:, :FT_VOCAB].set(
        jnp.dot(w_ft, params["fasttext_emb"].T, precision=hi)).astype(jnp.bfloat16)
    b_t = b_fused.T                                                         # (8, 1) f32

    # --- lane-dense token layout: tokens on the 128-lane axis, padded --------
    # Keep >= 2 grid steps when N allows it (engage both TCs on v7x) and cap
    # the tile so per-step VMEM stays well under the scoped limit.
    half = _round_up(_cdiv(N, 2), 128)
    tile = max(128, min(_round_up(tile_tokens, 128), half))
    n_pad = _round_up(N, tile)
    pad = ((0, 0), (0, n_pad - N))
    si = jnp.pad(token_shape.reshape(1, N).astype(jnp.int32), pad)
    fi = jnp.pad(fasttext.reshape(1, N).astype(jnp.int32), pad)
    tg = jnp.pad(tag_true.reshape(1, N).astype(jnp.int32), pad,
                 constant_values=-1)            # padded tokens get masked out
    idx = jnp.concatenate([si, fi, tg], axis=0)                             # (3, n_pad)

    idx_spec = pl.BlockSpec((3, tile), lambda i: (0, i))
    out_spec = pl.BlockSpec((2, tile), lambda i: (0, i))
    vmem_whole = pl.BlockSpec(memory_space=pltpu.MemorySpace.VMEM)

    packed = pl.pallas_call(
        tagger_kernel,
        out_shape=jax.ShapeDtypeStruct((2, n_pad), jnp.float32),
        grid_spec=pltpu.PrefetchScalarGridSpec(
            num_scalar_prefetch=0,
            grid=(n_pad // tile,),
            in_specs=[
                idx_spec,      # packed shape/fasttext/tag indices (streamed)
                vmem_whole,    # fused shape logit table   (tiny, VMEM resident)
                vmem_whole,    # fused fasttext logit table
                vmem_whole,    # fused bias
            ],
            out_specs=out_spec,
        ),
        compiler_params=pltpu.CompilerParams(
            # independent token tiles -> megacore-shardable on v7x (2 TCs)
            dimension_semantics=("parallel",),
            vmem_limit_bytes=48 * 1024 * 1024),
    )(idx, l_sh, l_ft, b_t)

    tag_pred = packed[0, :N].astype(jnp.int32).reshape(B, T)
    nll = packed[1, :N].reshape(B, T)

    # loss combination: per-sequence cross_entropy mean over valid tokens,
    # summed over batch, divided by total #valid tokens (as in the module).
    mask = tag_true != -1
    per_row_valid = mask.sum(axis=1).astype(jnp.float32)
    per_row_loss = jnp.where(per_row_valid > 0,
                             nll.sum(axis=1) / jnp.maximum(per_row_valid, 1.0),
                             0.0)               # guard all-ignored sequences
    total_valid = mask.sum().astype(jnp.float32)
    loss = jnp.where(total_valid > 0,
                     per_row_loss.sum() / jnp.maximum(total_valid, 1.0),
                     0.0)                       # guard all-ignored batch (0/0)
    return tag_pred, loss


def ref_forward(token_shape, fasttext, tag_true, params):
    """Pure-JAX reference of the original (unfused) forward pass."""
    hi = jax.lax.Precision.HIGHEST
    shape_repr = params["shape_emb"][token_shape]
    ft_repr = params["fasttext_emb"][fasttext]
    token_repr = jnp.concatenate([shape_repr, ft_repr], axis=2)
    h = jnp.dot(token_repr, params["relearn_w"], precision=hi) + params["relearn_b"][0]
    logits = jnp.dot(h, params["out_w"], precision=hi) + params["out_b"][0]
    logp = jax.nn.log_softmax(logits, axis=-1)
    tags_c = jnp.where(tag_true == -1, 0, tag_true)
    nll = -jnp.take_along_axis(logp, tags_c[..., None], axis=-1)[..., 0]
    mask = tag_true != -1
    nll = jnp.where(mask, nll, 0.0)
    per_row_loss = nll.sum(axis=1) / mask.sum(axis=1).astype(jnp.float32)
    loss = per_row_loss.sum() / mask.sum().astype(jnp.float32)
    return logits, jnp.argmax(logits, axis=-1), loss


if __name__ == "__main__":
    key = jax.random.PRNGKey(0)
    kp, k1, k2, k3 = jax.random.split(key, 4)
    params = init_params(kp)

    B, T = 2, 64
    token_shape = jax.random.randint(k1, (B, T), 0, NSHAPES, dtype=jnp.int32)
    fasttext = jax.random.randint(k2, (B, T), 0, FT_VOCAB, dtype=jnp.int32)
    tag_true = jax.random.randint(k3, (B, T), 0, NTAGS, dtype=jnp.int32)
    # simulate padded sequences: token_len = [64, 48] -> pad with ignore_index -1
    token_len = jnp.array([64, 48], dtype=jnp.int32)
    pos = jnp.arange(T)[None, :]
    tag_true = jnp.where(pos < token_len[:, None], tag_true, -1)

    tag_pred, loss = sequence_tagger_forward(token_shape, fasttext, tag_true, params)
    jax.block_until_ready((tag_pred, loss))

    # sanity check against a pure-JAX (unfused, high-precision) reference
    ref_logits, ref_pred, ref_loss = ref_forward(token_shape, fasttext, tag_true, params)
    np.testing.assert_allclose(np.asarray(loss), np.asarray(ref_loss),
                               rtol=1e-3, atol=1e-3)
    # argmax must agree with the reference up to floating-point near-ties
    # between the fused (bf16-table) and unfused logits: the logit of the
    # kernel's predicted tag must be within tolerance of the reference max.
    ref_logits = np.asarray(ref_logits)
    picked = np.take_along_axis(ref_logits, np.asarray(tag_pred)[..., None],
                                axis=-1)[..., 0]
    np.testing.assert_allclose(picked, ref_logits.max(axis=-1), rtol=0, atol=2e-3)

    print("KERNEL_OK")
</pallas_src>

<mosaic_0001>
module attributes {stable_mosaic.version = 11 : i64} {
  func.func @tagger_kernel(%arg0: i32, %arg1: memref<3x128xi32, #tpu.memory_space<vmem>>, %arg2: memref<8x16xbf16, #tpu.memory_space<vmem>>, %arg3: memref<8x56xbf16, #tpu.memory_space<vmem>>, %arg4: memref<8x1xf32, #tpu.memory_space<vmem>>, %arg5: memref<2x128xf32, #tpu.memory_space<vmem>>) attributes {dimension_semantics = [#tpu.dimension_semantics<parallel>], iteration_bounds = array<i64: 1>, scalar_prefetch = 0 : i64, scratch_operands = 0 : i64, tpu.core_type = #tpu.core_type<tc>, window_params = [{transform_indices = @transform_0, window_bounds = array<i64: 3, 128>}, {pipeline_mode = #tpu.pipeline_mode<synchronous>, transform_indices = @transform_1, window_bounds = array<i64: 8, 16>}, {pipeline_mode = #tpu.pipeline_mode<synchronous>, transform_indices = @transform_2, window_bounds = array<i64: 8, 56>}, {pipeline_mode = #tpu.pipeline_mode<synchronous>, transform_indices = @transform_3, window_bounds = array<i64: 8, 1>}, {transform_indices = @transform_4, window_bounds = array<i64: 2, 128>}]} {
    %c0 = arith.constant 0 : index
    %c0_0 = arith.constant 0 : index
    %0 = vector.load %arg1[%c0, %c0_0] : memref<3x128xi32, #tpu.memory_space<vmem>>, vector<3x128xi32>
    %1 = vector.extract_strided_slice %0 {offsets = [0, 0], sizes = [1, 128], strides = [1, 1]} : vector<3x128xi32> to vector<1x128xi32>
    %2 = vector.extract_strided_slice %0 {offsets = [1, 0], sizes = [1, 128], strides = [1, 1]} : vector<3x128xi32> to vector<1x128xi32>
    %3 = vector.extract_strided_slice %0 {offsets = [2, 0], sizes = [1, 128], strides = [1, 1]} : vector<3x128xi32> to vector<1x128xi32>
    %4 = tpu.iota {dimensions = array<i32: 0>} : vector<56x128xi32>
    %5 = vector.extract_strided_slice %4 {offsets = [0, 0], sizes = [16, 128], strides = [1, 1]} : vector<56x128xi32> to vector<16x128xi32>
    %6 = vector.broadcast %1 : vector<1x128xi32> to vector<16x128xi32>
    %7 = arith.cmpi eq, %5, %6 : vector<16x128xi32>
    %8 = arith.extui %7 : vector<16x128xi1> to vector<16x128xi32>
    %9 = arith.sitofp %8 : vector<16x128xi32> to vector<16x128xf32>
    %10 = arith.truncf %9 : vector<16x128xf32> to vector<16x128xbf16>
    %11 = vector.broadcast %2 : vector<1x128xi32> to vector<56x128xi32>
    %12 = arith.cmpi eq, %4, %11 : vector<56x128xi32>
    %13 = arith.extui %12 : vector<56x128xi1> to vector<56x128xi32>
    %14 = arith.sitofp %13 : vector<56x128xi32> to vector<56x128xf32>
    %15 = arith.truncf %14 : vector<56x128xf32> to vector<56x128xbf16>
    %c0_1 = arith.constant 0 : index
    %c0_2 = arith.constant 0 : index
    %16 = vector.load %arg2[%c0_1, %c0_2] : memref<8x16xbf16, #tpu.memory_space<vmem>>, vector<8x16xbf16>
    %cst = arith.constant dense<0.000000e+00> : vector<8x128xf32>
    %17 = tpu.matmul %16, %10, %cst {dimension_numbers = #tpu.dot_dimension_numbers<[1], [0], [0], [1], [0, 0, 1, 1], [], []>} : vector<8x16xbf16>, vector<16x128xbf16>, vector<8x128xf32> -> vector<8x128xf32>
    %c0_3 = arith.constant 0 : index
    %c0_4 = arith.constant 0 : index
    %18 = vector.load %arg3[%c0_3, %c0_4] : memref<8x56xbf16, #tpu.memory_space<vmem>>, vector<8x56xbf16>
    %cst_5 = arith.constant dense<0.000000e+00> : vector<8x128xf32>
    %19 = tpu.matmul %18, %15, %cst_5 {dimension_numbers = #tpu.dot_dimension_numbers<[1], [0], [0], [1], [0, 0, 1, 1], [], []>} : vector<8x56xbf16>, vector<56x128xbf16>, vector<8x128xf32> -> vector<8x128xf32>
    %20 = arith.addf %17, %19 : vector<8x128xf32>
    %c0_6 = arith.constant 0 : index
    %c0_7 = arith.constant 0 : index
    %21 = vector.load %arg4[%c0_6, %c0_7] : memref<8x1xf32, #tpu.memory_space<vmem>>, vector<8x1xf32>
    %22 = vector.broadcast %21 : vector<8x1xf32> to vector<8x128xf32>
    %23 = arith.addf %20, %22 : vector<8x128xf32>
    %cst_8 = arith.constant dense<0xFF800000> : vector<128xf32>
    %24 = vector.multi_reduction <maximumf>, %23, %cst_8 [0] : vector<8x128xf32> to vector<128xf32>
    %25 = vector.shape_cast %24 : vector<128xf32> to vector<1x128xf32>
    %26 = vector.broadcast %25 : vector<1x128xf32> to vector<8x128xf32>
    %27 = arith.subf %23, %26 : vector<8x128xf32>
    %28 = math.exp %27 : vector<8x128xf32>
    %cst_9 = arith.constant dense<0.000000e+00> : vector<128xf32>
    %29 = vector.multi_reduction <add>, %28, %cst_9 [0] : vector<8x128xf32> to vector<128xf32>
    %30 = vector.shape_cast %29 : vector<128xf32> to vector<1x128xf32>
    %31 = math.log %30 : vector<1x128xf32>
    %32 = vector.extract_strided_slice %4 {offsets = [0, 0], sizes = [8, 128], strides = [1, 1]} : vector<56x128xi32> to vector<8x128xi32>
    %33 = vector.broadcast %3 : vector<1x128xi32> to vector<8x128xi32>
    %34 = arith.cmpi eq, %32, %33 : vector<8x128xi32>
    %cst_10 = arith.constant 0.000000e+00 : f32
    %35 = vector.broadcast %cst_10 : f32 to vector<8x128xf32>
    %36 = arith.select %34, %27, %35 : vector<8x128xi1>, vector<8x128xf32>
    %cst_11 = arith.constant dense<0.000000e+00> : vector<128xf32>
    %37 = vector.multi_reduction <add>, %36, %cst_11 [0] : vector<8x128xf32> to vector<128xf32>
    %38 = vector.shape_cast %37 : vector<128xf32> to vector<1x128xf32>
    %c-1_i32 = arith.constant -1 : i32
    %39 = vector.broadcast %c-1_i32 : i32 to vector<1x128xi32>
    %40 = arith.cmpi ne, %3, %39 : vector<1x128xi32>
    %41 = arith.subf %31, %38 : vector<1x128xf32>
    %cst_12 = arith.constant 0.000000e+00 : f32
    %42 = vector.broadcast %cst_12 : f32 to vector<1x128xf32>
    %43 = arith.select %40, %41, %42 : vector<1x128xi1>, vector<1x128xf32>
    %44 = vector.broadcast %25 : vector<1x128xf32> to vector<8x128xf32>
    %45 = arith.cmpf oeq, %23, %44 : vector<8x128xf32>
    %c8_i32 = arith.constant 8 : i32
    %46 = vector.broadcast %c8_i32 : i32 to vector<8x128xi32>
    %47 = arith.select %45, %32, %46 : vector<8x128xi1>, vector<8x128xi32>
    %cst_13 = arith.constant dense<2147483647> : vector<128xi32>
    %48 = vector.multi_reduction <minsi>, %47, %cst_13 [0] : vector<8x128xi32> to vector<128xi32>
    %49 = vector.shape_cast %48 : vector<128xi32> to vector<1x128xi32>
    %50 = arith.sitofp %49 : vector<1x128xi32> to vector<1x128xf32>
    %51 = tpu.concatenate %50, %43 in 0 : vector<1x128xf32>, vector<1x128xf32> -> vector<2x128xf32>
    %c0_14 = arith.constant 0 : index
    %c0_15 = arith.constant 0 : index
    %52 = vector.load %arg5[%c0_14, %c0_15] : memref<2x128xf32, #tpu.memory_space<vmem>>, vector<2x128xf32>
    tpu.vector_store %arg5[%c0_14, %c0_15], %51 {strides = array<i32>} : memref<2x128xf32, #tpu.memory_space<vmem>>, vector<2x128xf32>,
    return
  }
  func.func @transform_0(%arg0: i32) -> (i32, i32) {
    %c0_i32 = arith.constant 0 : i32
    %c0_i32_0 = arith.constant 0 : i32
    return %c0_i32, %arg0 : i32, i32
  }
  func.func @transform_1(%arg0: i32) -> (i32, i32) {
    %c0_i32 = arith.constant 0 : i32
    %c0_i32_0 = arith.constant 0 : i32
    %c0_i32_1 = arith.constant 0 : i32
    return %c0_i32, %c0_i32_0 : i32, i32
  }
  func.func @transform_2(%arg0: i32) -> (i32, i32) {
    %c0_i32 = arith.constant 0 : i32
    %c0_i32_0 = arith.constant 0 : i32
    %c0_i32_1 = arith.constant 0 : i32
    return %c0_i32, %c0_i32_0 : i32, i32
  }
  func.func @transform_3(%arg0: i32) -> (i32, i32) {
    %c0_i32 = arith.constant 0 : i32
    %c0_i32_0 = arith.constant 0 : i32
    %c0_i32_1 = arith.constant 0 : i32
    return %c0_i32, %c0_i32_0 : i32, i32
  }
  func.func @transform_4(%arg0: i32) -> (i32, i32) {
    %c0_i32 = arith.constant 0 : i32
    %c0_i32_0 = arith.constant 0 : i32
    return %c0_i32, %arg0 : i32, i32
  }
}

</mosaic_0001>

<llo_original>
// kernel: tpu_custom_call.1
$region0: #{tpu_custom_call.1}
  #allocation0 [shape = 'u32[]', space=smem, size = 0x4, offset = 0x4, fixed_abs, tag = 'smem constant byte address 0x4 - core index']
  #allocation1 [shape = 'u32[144,128]{1,0:T(1,128)}', space=vmem, size = 0x12000, scoped, tag = 'internal scratch']
  %s0 = inlined_call_operand.vmem [shape: s32[3,128], index: 0, kind: input, shape index: {}]
  %s1 = inlined_call_operand.vmem [shape: bf16[8,16], index: 1, kind: input, shape index: {}]
  %s2 = inlined_call_operand.vmem [shape: bf16[8,56], index: 2, kind: input, shape index: {}]
  %s3 = inlined_call_operand.vmem [shape: f32[8,1], index: 3, kind: input, shape index: {}]
  %s4 = inlined_call_operand.hbm [shape: f32[2,128], index: 4, kind: output, shape index: {}]
  %s5 = sld [smem:[#allocation0]]
  $region26: #{tpu_custom_call.1} parent=0
    _
  %s7 = ssub.s32 1, %s5
  %s8 = scalar_select 0, %s7, %s5
  $region1: #{tpu_custom_call.1} parent=0
    #allocation2 [shape = 'u8[1024]{0}', space=vmem, size = 0x400, scoped, tag = 'output window, operand 0, single buffered']
    #allocation3 [shape = 's32[1]{0}', space=sflag, size = 0x4, scoped, tag = 'scoped memory for tpu_custom_call.1']
    %9 = vsyncpa [#allocation3], 0
    // Predicated region
    $region2: #{tpu_custom_call.1} parent=1 // pred_check
      _
    $region3: #{tpu_custom_call.1} parent=1 // pred_check_branch
      %11 = sbr.rel (0) target = $region5
    $region4: #{tpu_custom_call.1} parent=1 // pred_region
      _
    $region5: #{tpu_custom_call.1} parent=1 // pred_fallthru
      _
    // Predicated region
    $region6: #{tpu_custom_call.1} parent=1 // pred_check
      _
    $region7: #{tpu_custom_call.1} parent=1 // pred_check_branch
      %13 = sbr.rel (0) target = $region9
    $region8: #{tpu_custom_call.1} parent=1 // pred_region
      _
    $region9: #{tpu_custom_call.1} parent=1 // pred_fallthru
      _
    // Predicated region
    $region10: #{tpu_custom_call.1} parent=1 // pred_check
      _
    $region11: #{tpu_custom_call.1} parent=1 // pred_check_branch
      %15 = sbr.rel (0) target = $region13
    $region12: #{tpu_custom_call.1} parent=1 // pred_region
      _
    $region13: #{tpu_custom_call.1} parent=1 // pred_fallthru
      _
    // Predicated region
    $region14: #{tpu_custom_call.1} parent=1 // pred_check
      _
    $region15: #{tpu_custom_call.1} parent=1 // pred_check_branch
      %17 = sbr.rel (0) target = $region17
    $region16: #{tpu_custom_call.1} parent=1 // pred_region
      _
    $region17: #{tpu_custom_call.1} parent=1 // pred_fallthru
      _
    %v19 = vld [vmem:[%s0] sm:$0x7]
    %v20 = vlaneseq
    %v21 = vshrl.u32 %v20, 7
    %v22 = vadd.s32 %v21, 8
    %v23 = vadd.s32 %v21, 16
    %v24 = vadd.s32 %v21, 24
    %v25 = vadd.s32 %v21, 32
    %v26 = vadd.s32 %v21, 40
    %v27 = vadd.s32 %v21, 48
    %v28 = vlaneseq
    %v29 = vshrl.u32 %v28, 7
    %v30 = vsub.s32 0, %v29
    %v31 = vrot.slane %v19, %v30
    %vm32 = vcmp.eq.s32.totalorder %v21, %v31
    %vm33 = vcmp.eq.s32.totalorder %v22, %v31
    %v34 = vsel %vm32, 1, 0
    %v35 = vsel %vm33, 1, 0
    %v36 = vcvt.s32.f32 %v34
    %v37 = vcvt.s32.f32 %v35
    %v38 = vpack.c.bf16 %v37, %v36
    %v39 = vlaneseq
    %v40 = vshrl.u32 %v39, 7
    %v41 = vsub.s32 1, %v40
    %v42 = vrot.slane %v19, %v41
    %vm43 = vcmp.eq.s32.totalorder %v21, %v42
    %vm44 = vcmp.eq.s32.totalorder %v22, %v42
    %vm45 = vcmp.eq.s32.totalorder %v23, %v42
    %vm46 = vcmp.eq.s32.totalorder %v24, %v42
    %vm47 = vcmp.eq.s32.totalorder %v25, %v42
    %vm48 = vcmp.eq.s32.totalorder %v26, %v42
    %vm49 = vcmp.eq.s32.totalorder %v27, %v42
    %v50 = vsel %vm43, 1, 0
    %v51 = vsel %vm44, 1, 0
    %v52 = vsel %vm45, 1, 0
    %v53 = vsel %vm46, 1, 0
    %v54 = vsel %vm47, 1, 0
    %v55 = vsel %vm48, 1, 0
    %v56 = vsel %vm49, 1, 0
    %v57 = vcvt.s32.f32 %v50
    %v58 = vcvt.s32.f32 %v51
    %v59 = vcvt.s32.f32 %v52
    %v60 = vcvt.s32.f32 %v53
    %v61 = vcvt.s32.f32 %v54
    %v62 = vcvt.s32.f32 %v55
    %v63 = vcvt.s32.f32 %v56
    %v64 = vpack.c.bf16 %v58, %v57
    %v65 = vpack.c.bf16 %v60, %v59
    %v66 = vpack.c.bf16 %v62, %v61
    %v67 = vpack.c.bf16 %v63, %v63
    %v68 = vld [vmem:[%s1] sm:$0xf]
    %v69 = vld [vmem:[%s2] sm:$0xf]
    %vm70 = vcmask 457728
    %v72 = vsel %vm70, %v69, 0
    %vm74 = vcmask 1043456
    %v76 = vsel %vm74, %v67, 0
    %78 = vmatprep.subr.bf16.mxu0 0
    %79 = vmatpush1.bf16.msra.mxu0 %v64
    %80 = vmatprep.subr.bf16.mxu0 0
    %81 = vmatpush1.bf16.msra.mxu0 %v65
    %82 = vmatprep.subr.bf16.mxu0 0
    %83 = vmatpush1.bf16.msra.mxu0 %v66
    %84 = vmatprep.subr.bf16.mxu0 0
    %85 = vmatpush1.bf16.msra.mxu0 %v76
    %86 = vmatprep.subr.bf16.mxu0 0
    %87 = vmatpush1.bf16.msra.mxu0 0
    %88 = vmatprep.subr.bf16.mxu0 0
    %89 = vmatpush1.bf16.msra.mxu0 0
    %90 = vmatprep.subr.bf16.mxu0 0
    %91 = vmatpush1.bf16.msra.mxu0 0
    %92 = vmatprep.subr.bf16.mxu0 0
    %93 = vmatpush1.bf16.msra.mxu0 0
    %94 = vmatprep.subr.bf16.mxu0 0
    %95 = vmatpush1.bf16.msra.mxu0 0
    %96 = vmatprep.subr.bf16.mxu0 0
    %97 = vmatpush1.bf16.msra.mxu0 0
    %98 = vmatprep.subr.bf16.mxu0 0
    %99 = vmatpush1.bf16.msra.mxu0 0
    %100 = vmatprep.subr.bf16.mxu0 0
    %101 = vmatpush1.bf16.msra.mxu0 0
    %102 = vmatprep.subr.bf16.mxu0 0
    %103 = vmatpush1.bf16.msra.mxu0 0
    %104 = vmatprep.subr.bf16.mxu0 0
    %105 = vmatpush1.bf16.msra.mxu0 0
    %106 = vmatprep.subr.bf16.mxu0 0
    %107 = vmatpush1.bf16.msra.mxu0 0
    %108 = vmatprep.subr.bf16.mxu0 0
    %109 = vmatpush1.bf16.msra.mxu0 0
    %110 = vmatprep.mubr.bf16.mxu0 0
    %111 = vmatmul.mubr.bf16.gmra.mrb[0].mxu0 %v72
    %v112 = vpop.f32.mrb[0].mxu0
    %v113 = vadd.f32 0.0, %v112
    %v114 = vpop.f32.mrb[0].mxu0
    %v115 = vpop.f32.mrb[0].mxu0
    %v116 = vpop.f32.mrb[0].mxu0
    %117 = vdwg.mxu0
    %vm118 = vcmask 130048
    %v120 = vsel %vm118, %v68, 0
    %122 = vmatprep.subr.bf16.mxu0 0
    %123 = vmatpush1.bf16.msra.mxu0 %v38
    %124 = vmatprep.subr.bf16.mxu0 0
    %125 = vmatpush1.bf16.msra.mxu0 0
    %126 = vmatprep.subr.bf16.mxu0 0
    %127 = vmatpush1.bf16.msra.mxu0 0
    %128 = vmatprep.subr.bf16.mxu0 0
    %129 = vmatpush1.bf16.msra.mxu0 0
    %130 = vmatprep.subr.bf16.mxu0 0
    %131 = vmatpush1.bf16.msra.mxu0 0
    %132 = vmatprep.subr.bf16.mxu0 0
    %133 = vmatpush1.bf16.msra.mxu0 0
    %134 = vmatprep.subr.bf16.mxu0 0
    %135 = vmatpush1.bf16.msra.mxu0 0
    %136 = vmatprep.subr.bf16.mxu0 0
    %137 = vmatpush1.bf16.msra.mxu0 0
    %138 = vmatprep.subr.bf16.mxu0 0
    %139 = vmatpush1.bf16.msra.mxu0 0
    %140 = vmatprep.subr.bf16.mxu0 0
    %141 = vmatpush1.bf16.msra.mxu0 0
    %142 = vmatprep.subr.bf16.mxu0 0
    %143 = vmatpush1.bf16.msra.mxu0 0
    %144 = vmatprep.subr.bf16.mxu0 0
    %145 = vmatpush1.bf16.msra.mxu0 0
    %146 = vmatprep.subr.bf16.mxu0 0
    %147 = vmatpush1.bf16.msra.mxu0 0
    %148 = vmatprep.subr.bf16.mxu0 0
    %149 = vmatpush1.bf16.msra.mxu0 0
    %150 = vmatprep.subr.bf16.mxu0 0
    %151 = vmatpush1.bf16.msra.mxu0 0
    %152 = vmatprep.subr.bf16.mxu0 0
    %153 = vmatpush1.bf16.msra.mxu0 0
    %154 = vmatprep.mubr.bf16.mxu0 0
    %155 = vmatmul.mubr.bf16.gmra.mrb[0].mxu0 %v120
    %v156 = vpop.f32.mrb[0].mxu0
    %v157 = vadd.f32 %v113, %v156
    %v158 = vpop.f32.mrb[0].mxu0
    %v159 = vpop.f32.mrb[0].mxu0
    %v160 = vpop.f32.mrb[0].mxu0
    %161 = vdwg.mxu0
    %v162 = vld [vmem:[%s3] sm:$0xff]
    %164 = vset.pattern.permute.xlu0 0
    %165 = vperm.xlu0 %164, %v162
    %v166 = vpop.permute.xlu0 %165
    %v168 = vadd.f32 %v157, %v166
    %v169 = vrot.slane %v168, 4
    %v170 = vmax.f32 %v168, %v169
    %v171 = vrot.slane %v170, 2
    %v172 = vmax.f32 %v170, %v171
    %v173 = vrot.slane %v172, 1
    %v174 = vmax.f32 %v172, %v173
    %v175 = vsub.f32 %v168, %v174
    %v176 = vmul.f32 %v175, 1.442695
    %v177 = vpow.pop %v176
    %v178 = vrot.slane %v177, 4
    %v179 = vadd.f32 %v177, %v178
    %v180 = vrot.slane %v179, 2
    %v181 = vadd.f32 %v179, %v180
    %v182 = vrot.slane %v181, 1
    %v183 = vadd.f32 %v181, %v182
    %v184 = vlog2.pop %v183
    %v185 = vmul.f32 %v184, 0.6931472
    %v186 = vlaneseq
    %v187 = vshrl.u32 %v186, 7
    %v188 = vsub.s32 2, %v187
    %v189 = vrot.slane %v19, %v188
    %vm190 = vcmp.eq.s32.totalorder %v21, %v189
    %v191 = vsel %vm190, %v175, 0.0
    %v192 = vrot.slane %v191, 4
    %v193 = vadd.f32 %v191, %v192
    %v194 = vrot.slane %v193, 2
    %v195 = vadd.f32 %v193, %v194
    %v196 = vrot.slane %v195, 1
    %v197 = vadd.f32 %v195, %v196
    %vm198 = vcmp.ne.s32.totalorder %v19, 4294967295
    %v199 = vsub.f32 %v185, %v197
    %v200 = vsel %vm198, %v199, 0.0
    %vm201 = vcmp.eq.f32.partialorder %v168, %v174
    %v202 = vsel %vm201, %v21, 8
    %v203 = vrot.slane %v202, 4
    %vm204 = vcmp.lt.s32.totalorder %v202, %v203
    %v205 = vsel %vm204, %v202, %v203
    %v206 = vrot.slane %v205, 2
    %vm207 = vcmp.lt.s32.totalorder %v205, %v206
    %v208 = vsel %vm207, %v205, %v206
    %v209 = vrot.slane %v208, 1
    %vm210 = vcmp.lt.s32.totalorder %v208, %v209
    %v211 = vsel %vm210, %v208, %v209
    %v212 = vcvt.s32.f32 %v211
    %v214 = vrot.slane %v200, 1
    %vm216 = vcmask 1040384
    %v217 = vsel %vm216, %v212, %v214
    %218 = vst [vmem:[#allocation2] sm:$0x3] %v217
    // Predicated region
    $region18: #{tpu_custom_call.1} parent=1 // pred_check
      _
    $region19: #{tpu_custom_call.1} parent=1 // pred_check_branch
      %220 = sbr.rel (0) target = $region21
    $region20: #{tpu_custom_call.1} parent=1 // pred_region
      %s222 = ssub.s32 32, 32
      %223 = vsyncadd [#allocation3], %s222
      %s225 = sshll.u32 [#allocation2], 4
      %s226 = int_to_ptr.vmem [resolvable:$true] %s225
      %228 = dma.vmem_to_hbm [thread:$0]  %s226, 32, %s4, [#allocation3]
    $region21: #{tpu_custom_call.1} parent=1 // pred_fallthru
      _
    // Predicated region
    $region22: #{tpu_custom_call.1} parent=1 // pred_check
      _
    $region23: #{tpu_custom_call.1} parent=1 // pred_check_branch
      %230 = sbr.rel (0) target = $region25
    $region24: #{tpu_custom_call.1} parent=1 // pred_region
      %231 = dma.done [#allocation3], 32
    $region25: #{tpu_custom_call.1} parent=1 // pred_fallthru
      _
    %232 = vsyncpa [#allocation3], 1

</llo_original>
